<compile_context>
chip_gen: v7x
topology: tpu7x:2x2x1
jax: 0.10.0
libtpu: 0.0.40
codegen_flags: <defaults>
</compile_context>

<pallas_src>
import jax
import jax.numpy as jnp
from jax.experimental import pallas as pl
from jax.experimental.pallas import tpu as pltpu


def vae_forward_kernel(
    x_ref,        # (TB, D_in)        f32
    w_in_ref,     # (D_in, H)         bf16
    b_in_ref,     # (1, H)            f32
    w_stats_ref,  # (H, 2L)           bf16  (fused [w_mean | w_var])
    b_stats_ref,  # (1, 2L)           f32   (fused [b_mean | b_var])
    eps_ref,      # (TB, L)           f32   uniform [0,1) noise
    w_dh_ref,     # (L, H)            bf16
    b_dh_ref,     # (1, H)            f32
    w_do_ref,     # (H, D_out)        bf16
    b_do_ref,     # (1, D_out)        f32
    out_ref,      # out (TB, 2L+D_out) f32  [mean | log_var | x_hat]
):
    L = eps_ref.shape[-1]

    # ----- Encoder -----
    x = x_ref[...].astype(jnp.bfloat16)
    h = jnp.dot(x, w_in_ref[...], preferred_element_type=jnp.float32) + b_in_ref[...]
    h = jnp.maximum(h, 0.0).astype(jnp.bfloat16)          # relu -> bf16 for MXU

    # Fused mean / log_var head: single matmul instead of two.
    stats = (
        jnp.dot(h, w_stats_ref[...], preferred_element_type=jnp.float32)
        + b_stats_ref[...]
    )
    mean = stats[:, :L]
    log_var = stats[:, L:]

    # Reparameterization: z = mean + exp(0.5 * log_var) * epsilon, eps ~ U[0,1)
    std = jnp.exp(0.5 * log_var)                           # EUP
    z = (mean + std * eps_ref[...]).astype(jnp.bfloat16)

    # ----- Decoder -----
    hd = jnp.dot(z, w_dh_ref[...], preferred_element_type=jnp.float32) + b_dh_ref[...]
    hd = jnp.maximum(hd, 0.0).astype(jnp.bfloat16)         # relu

    logits = (
        jnp.dot(hd, w_do_ref[...], preferred_element_type=jnp.float32)
        + b_do_ref[...]
    )
    # sigmoid(x) = 1 / (1 + exp(-x)) via EUP exp + approximate reciprocal.
    x_hat = pl.reciprocal(1.0 + jnp.exp(-logits), approx=True)

    # Single fused, lane-denser output slab: [mean | log_var | x_hat].
    out_ref[...] = jnp.concatenate([stats, x_hat], axis=-1).astype(out_ref.dtype)


def vae_forward(x, params, eps, *, batch_tile=128):
    """Full VAE forward in one fused Pallas kernel, tiled over batch."""
    B, D_in = x.shape
    H = params["w_in"].shape[1]
    L = params["w_mean"].shape[1]
    D_out = params["w_do"].shape[1]

    # Fuse the encoder head (mean | var) into a single weight / bias.
    w_stats = jnp.concatenate([params["w_mean"], params["w_var"]], axis=1)
    b_stats = jnp.concatenate([params["b_mean"], params["b_var"]], axis=1)

    # MXU-native bf16 weights; biases stay f32 (added to f32 accumulators).
    bf16 = jnp.bfloat16
    w_in = params["w_in"].astype(bf16)
    w_stats = w_stats.astype(bf16)
    w_dh = params["w_dh"].astype(bf16)
    w_do = params["w_do"].astype(bf16)

    # Batch tile: multiple of 8 (sublane) or the full batch.
    tb = B if B <= batch_tile else batch_tile
    grid = (pl.cdiv(B, tb),)

    batch_map = lambda i: (i, 0)   # tiled over batch
    const_map = lambda i: (0, 0)   # weights resident across all batch tiles

    in_specs = [
        pl.BlockSpec((tb, D_in), batch_map),
        pl.BlockSpec((D_in, H), const_map),
        pl.BlockSpec((1, H), const_map),
        pl.BlockSpec((H, 2 * L), const_map),
        pl.BlockSpec((1, 2 * L), const_map),
        pl.BlockSpec((tb, L), batch_map),
        pl.BlockSpec((L, H), const_map),
        pl.BlockSpec((1, H), const_map),
        pl.BlockSpec((H, D_out), const_map),
        pl.BlockSpec((1, D_out), const_map),
    ]
    out_specs = pl.BlockSpec((tb, 2 * L + D_out), batch_map)
    out_shape = jax.ShapeDtypeStruct((B, 2 * L + D_out), jnp.float32)

    out = pl.pallas_call(
        vae_forward_kernel,
        out_shape=out_shape,
        grid=grid,
        in_specs=in_specs,
        out_specs=out_specs,
        compiler_params=pltpu.CompilerParams(
            dimension_semantics=("parallel",),  # batch axis -> megacore on v7x
        ),
    )(
        x,
        w_in, params["b_in"],
        w_stats, b_stats,
        eps,
        w_dh, params["b_dh"],
        w_do, params["b_do"],
    )

    mean = out[:, :L]
    log_var = out[:, L:2 * L]
    x_hat = out[:, 2 * L:]
    return x_hat, mean, log_var


def init_params(key, input_dim, hidden_dim, latent_dim, output_dim):
    """Deterministic synthetic parameter init (roughly PyTorch Linear scale)."""
    keys = jax.random.split(key, 10)

    def linear(kw, kb, fan_in, fan_out):
        bound = 1.0 / jnp.sqrt(fan_in)
        w = jax.random.uniform(kw, (fan_in, fan_out), jnp.float32, -bound, bound)
        b = jax.random.uniform(kb, (1, fan_out), jnp.float32, -bound, bound)
        return w, b

    w_in, b_in = linear(keys[0], keys[1], input_dim, hidden_dim)
    w_mean, b_mean = linear(keys[2], keys[3], hidden_dim, latent_dim)
    w_var, b_var = linear(keys[4], keys[5], hidden_dim, latent_dim)
    w_dh, b_dh = linear(keys[6], keys[7], latent_dim, hidden_dim)
    w_do, b_do = linear(keys[8], keys[9], hidden_dim, output_dim)

    return dict(
        w_in=w_in, b_in=b_in,
        w_mean=w_mean, b_mean=b_mean,
        w_var=w_var, b_var=b_var,
        w_dh=w_dh, b_dh=b_dh,
        w_do=w_do, b_do=b_do,
    )


def vae_forward_ref(x, params, eps):
    """Pure-JAX reference mirroring the kernel's bf16-matmul / f32-accumulate math."""
    bf16 = jnp.bfloat16
    f32 = jnp.float32

    def mm(a, w):
        return jnp.dot(a.astype(bf16), w.astype(bf16), preferred_element_type=f32)

    h = jnp.maximum(mm(x, params["w_in"]) + params["b_in"], 0.0)
    mean = mm(h, params["w_mean"]) + params["b_mean"]
    log_var = mm(h, params["w_var"]) + params["b_var"]
    std = jnp.exp(0.5 * log_var)
    z = mean + std * eps
    hd = jnp.maximum(mm(z, params["w_dh"]) + params["b_dh"], 0.0)
    x_hat = jax.nn.sigmoid(mm(hd, params["w_do"]) + params["b_do"])
    return x_hat, mean, log_var


if __name__ == "__main__":
    # Small VAE: input_dim=32, hidden_dim=64, latent_dim=16, output_dim=32, batch=8
    B, D_IN, H, L, D_OUT = 8, 32, 64, 16, 32

    key = jax.random.PRNGKey(0)
    k_params, k_x, k_eps = jax.random.split(key, 3)

    params = init_params(k_params, D_IN, H, L, D_OUT)
    x = jax.random.normal(k_x, (B, D_IN), jnp.float32)
    # torch.rand_like -> uniform [0, 1)
    eps = jax.random.uniform(k_eps, (B, L), jnp.float32)

    x_hat, mean, log_var = vae_forward(x, params, eps)
    jax.block_until_ready((x_hat, mean, log_var))

    # Sanity check against pure-JAX reference (same bf16 matmul precision).
    x_hat_r, mean_r, log_var_r = vae_forward_ref(x, params, eps)
    assert jnp.allclose(mean, mean_r, atol=1e-3, rtol=1e-3)
    assert jnp.allclose(log_var, log_var_r, atol=1e-3, rtol=1e-3)
    # x_hat additionally uses the EUP approximate reciprocal -> looser tol.
    assert jnp.allclose(x_hat, x_hat_r, atol=1e-2, rtol=1e-2)

    print("KERNEL_OK")
</pallas_src>

<mosaic_0001>
module attributes {stable_mosaic.version = 11 : i64} {
  func.func @vae_forward_kernel(%arg0: i32, %arg1: memref<8x32xf32, #tpu.memory_space<vmem>>, %arg2: memref<32x64xbf16, #tpu.memory_space<vmem>>, %arg3: memref<1x64xf32, #tpu.memory_space<vmem>>, %arg4: memref<64x32xbf16, #tpu.memory_space<vmem>>, %arg5: memref<1x32xf32, #tpu.memory_space<vmem>>, %arg6: memref<8x16xf32, #tpu.memory_space<vmem>>, %arg7: memref<16x64xbf16, #tpu.memory_space<vmem>>, %arg8: memref<1x64xf32, #tpu.memory_space<vmem>>, %arg9: memref<64x32xbf16, #tpu.memory_space<vmem>>, %arg10: memref<1x32xf32, #tpu.memory_space<vmem>>, %arg11: memref<8x64xf32, #tpu.memory_space<vmem>>) attributes {dimension_semantics = [#tpu.dimension_semantics<parallel>], iteration_bounds = array<i64: 1>, scalar_prefetch = 0 : i64, scratch_operands = 0 : i64, tpu.core_type = #tpu.core_type<tc>, window_params = [{transform_indices = @transform_0, window_bounds = array<i64: 8, 32>}, {pipeline_mode = #tpu.pipeline_mode<synchronous>, transform_indices = @transform_1, window_bounds = array<i64: 32, 64>}, {pipeline_mode = #tpu.pipeline_mode<synchronous>, transform_indices = @transform_2, window_bounds = array<i64: 1, 64>}, {pipeline_mode = #tpu.pipeline_mode<synchronous>, transform_indices = @transform_3, window_bounds = array<i64: 64, 32>}, {pipeline_mode = #tpu.pipeline_mode<synchronous>, transform_indices = @transform_4, window_bounds = array<i64: 1, 32>}, {transform_indices = @transform_5, window_bounds = array<i64: 8, 16>}, {pipeline_mode = #tpu.pipeline_mode<synchronous>, transform_indices = @transform_6, window_bounds = array<i64: 16, 64>}, {pipeline_mode = #tpu.pipeline_mode<synchronous>, transform_indices = @transform_7, window_bounds = array<i64: 1, 64>}, {pipeline_mode = #tpu.pipeline_mode<synchronous>, transform_indices = @transform_8, window_bounds = array<i64: 64, 32>}, {pipeline_mode = #tpu.pipeline_mode<synchronous>, transform_indices = @transform_9, window_bounds = array<i64: 1, 32>}, {transform_indices = @transform_10, window_bounds = array<i64: 8, 64>}]} {
    %c0 = arith.constant 0 : index
    %c0_0 = arith.constant 0 : index
    %0 = vector.load %arg1[%c0, %c0_0] : memref<8x32xf32, #tpu.memory_space<vmem>>, vector<8x32xf32>
    %1 = arith.truncf %0 : vector<8x32xf32> to vector<8x32xbf16>
    %c0_1 = arith.constant 0 : index
    %c0_2 = arith.constant 0 : index
    %2 = vector.load %arg2[%c0_1, %c0_2] : memref<32x64xbf16, #tpu.memory_space<vmem>>, vector<32x64xbf16>
    %cst = arith.constant dense<0.000000e+00> : vector<8x64xf32>
    %3 = tpu.matmul %1, %2, %cst {dimension_numbers = #tpu.dot_dimension_numbers<[1], [0], [0], [1], [0, 0, 1, 1], [], []>} : vector<8x32xbf16>, vector<32x64xbf16>, vector<8x64xf32> -> vector<8x64xf32>
    %c0_3 = arith.constant 0 : index
    %c0_4 = arith.constant 0 : index
    %4 = vector.load %arg3[%c0_3, %c0_4] : memref<1x64xf32, #tpu.memory_space<vmem>>, vector<1x64xf32>
    %5 = vector.broadcast %4 : vector<1x64xf32> to vector<8x64xf32>
    %6 = arith.addf %3, %5 : vector<8x64xf32>
    %cst_5 = arith.constant 0.000000e+00 : f32
    %7 = vector.broadcast %cst_5 : f32 to vector<8x64xf32>
    %8 = arith.maximumf %6, %7 : vector<8x64xf32>
    %9 = arith.truncf %8 : vector<8x64xf32> to vector<8x64xbf16>
    %c0_6 = arith.constant 0 : index
    %c0_7 = arith.constant 0 : index
    %10 = vector.load %arg4[%c0_6, %c0_7] : memref<64x32xbf16, #tpu.memory_space<vmem>>, vector<64x32xbf16>
    %cst_8 = arith.constant dense<0.000000e+00> : vector<8x32xf32>
    %11 = tpu.matmul %9, %10, %cst_8 {dimension_numbers = #tpu.dot_dimension_numbers<[1], [0], [0], [1], [0, 0, 1, 1], [], []>} : vector<8x64xbf16>, vector<64x32xbf16>, vector<8x32xf32> -> vector<8x32xf32>
    %c0_9 = arith.constant 0 : index
    %c0_10 = arith.constant 0 : index
    %12 = vector.load %arg5[%c0_9, %c0_10] : memref<1x32xf32, #tpu.memory_space<vmem>>, vector<1x32xf32>
    %13 = vector.broadcast %12 : vector<1x32xf32> to vector<8x32xf32>
    %14 = arith.addf %11, %13 : vector<8x32xf32>
    %15 = vector.extract_strided_slice %14 {offsets = [0, 0], sizes = [8, 16], strides = [1, 1]} : vector<8x32xf32> to vector<8x16xf32>
    %16 = vector.extract_strided_slice %14 {offsets = [0, 16], sizes = [8, 16], strides = [1, 1]} : vector<8x32xf32> to vector<8x16xf32>
    %cst_11 = arith.constant 5.000000e-01 : f32
    %17 = vector.broadcast %cst_11 : f32 to vector<8x16xf32>
    %18 = arith.mulf %17, %16 : vector<8x16xf32>
    %19 = math.exp %18 : vector<8x16xf32>
    %c0_12 = arith.constant 0 : index
    %c0_13 = arith.constant 0 : index
    %20 = vector.load %arg6[%c0_12, %c0_13] : memref<8x16xf32, #tpu.memory_space<vmem>>, vector<8x16xf32>
    %21 = arith.mulf %19, %20 : vector<8x16xf32>
    %22 = arith.addf %15, %21 : vector<8x16xf32>
    %23 = arith.truncf %22 : vector<8x16xf32> to vector<8x16xbf16>
    %c0_14 = arith.constant 0 : index
    %c0_15 = arith.constant 0 : index
    %24 = vector.load %arg7[%c0_14, %c0_15] : memref<16x64xbf16, #tpu.memory_space<vmem>>, vector<16x64xbf16>
    %cst_16 = arith.constant dense<0.000000e+00> : vector<8x64xf32>
    %25 = tpu.matmul %23, %24, %cst_16 {dimension_numbers = #tpu.dot_dimension_numbers<[1], [0], [0], [1], [0, 0, 1, 1], [], []>} : vector<8x16xbf16>, vector<16x64xbf16>, vector<8x64xf32> -> vector<8x64xf32>
    %c0_17 = arith.constant 0 : index
    %c0_18 = arith.constant 0 : index
    %26 = vector.load %arg8[%c0_17, %c0_18] : memref<1x64xf32, #tpu.memory_space<vmem>>, vector<1x64xf32>
    %27 = vector.broadcast %26 : vector<1x64xf32> to vector<8x64xf32>
    %28 = arith.addf %25, %27 : vector<8x64xf32>
    %cst_19 = arith.constant 0.000000e+00 : f32
    %29 = vector.broadcast %cst_19 : f32 to vector<8x64xf32>
    %30 = arith.maximumf %28, %29 : vector<8x64xf32>
    %31 = arith.truncf %30 : vector<8x64xf32> to vector<8x64xbf16>
    %c0_20 = arith.constant 0 : index
    %c0_21 = arith.constant 0 : index
    %32 = vector.load %arg9[%c0_20, %c0_21] : memref<64x32xbf16, #tpu.memory_space<vmem>>, vector<64x32xbf16>
    %cst_22 = arith.constant dense<0.000000e+00> : vector<8x32xf32>
    %33 = tpu.matmul %31, %32, %cst_22 {dimension_numbers = #tpu.dot_dimension_numbers<[1], [0], [0], [1], [0, 0, 1, 1], [], []>} : vector<8x64xbf16>, vector<64x32xbf16>, vector<8x32xf32> -> vector<8x32xf32>
    %c0_23 = arith.constant 0 : index
    %c0_24 = arith.constant 0 : index
    %34 = vector.load %arg10[%c0_23, %c0_24] : memref<1x32xf32, #tpu.memory_space<vmem>>, vector<1x32xf32>
    %35 = vector.broadcast %34 : vector<1x32xf32> to vector<8x32xf32>
    %36 = arith.addf %33, %35 : vector<8x32xf32>
    %cst_25 = arith.constant 0.000000e+00 : f32
    %37 = vector.broadcast %cst_25 : f32 to vector<8x32xf32>
    %38 = arith.subf %37, %36 : vector<8x32xf32>
    %39 = math.exp %38 : vector<8x32xf32>
    %cst_26 = arith.constant 1.000000e+00 : f32
    %40 = vector.broadcast %cst_26 : f32 to vector<8x32xf32>
    %41 = arith.addf %40, %39 : vector<8x32xf32>
    %42 = tpu.reciprocal %41 {approx = true} : vector<8x32xf32> -> vector<8x32xf32>
    %43 = tpu.concatenate %14, %42 in 1 : vector<8x32xf32>, vector<8x32xf32> -> vector<8x64xf32>
    %c0_27 = arith.constant 0 : index
    %c0_28 = arith.constant 0 : index
    %44 = vector.load %arg11[%c0_27, %c0_28] : memref<8x64xf32, #tpu.memory_space<vmem>>, vector<8x64xf32>
    tpu.vector_store %arg11[%c0_27, %c0_28], %43 {strides = array<i32>} : memref<8x64xf32, #tpu.memory_space<vmem>>, vector<8x64xf32>,
    return
  }
  func.func @transform_0(%arg0: i32) -> (i32, i32) {
    %c0_i32 = arith.constant 0 : i32
    %c0_i32_0 = arith.constant 0 : i32
    return %arg0, %c0_i32 : i32, i32
  }
  func.func @transform_1(%arg0: i32) -> (i32, i32) {
    %c0_i32 = arith.constant 0 : i32
    %c0_i32_0 = arith.constant 0 : i32
    %c0_i32_1 = arith.constant 0 : i32
    return %c0_i32, %c0_i32_0 : i32, i32
  }
  func.func @transform_2(%arg0: i32) -> (i32, i32) {
    %c0_i32 = arith.constant 0 : i32
    %c0_i32_0 = arith.constant 0 : i32
    %c0_i32_1 = arith.constant 0 : i32
    return %c0_i32, %c0_i32_0 : i32, i32
  }
  func.func @transform_3(%arg0: i32) -> (i32, i32) {
    %c0_i32 = arith.constant 0 : i32
    %c0_i32_0 = arith.constant 0 : i32
    %c0_i32_1 = arith.constant 0 : i32
    return %c0_i32, %c0_i32_0 : i32, i32
  }
  func.func @transform_4(%arg0: i32) -> (i32, i32) {
    %c0_i32 = arith.constant 0 : i32
    %c0_i32_0 = arith.constant 0 : i32
    %c0_i32_1 = arith.constant 0 : i32
    return %c0_i32, %c0_i32_0 : i32, i32
  }
  func.func @transform_5(%arg0: i32) -> (i32, i32) {
    %c0_i32 = arith.constant 0 : i32
    %c0_i32_0 = arith.constant 0 : i32
    return %arg0, %c0_i32 : i32, i32
  }
  func.func @transform_6(%arg0: i32) -> (i32, i32) {
    %c0_i32 = arith.constant 0 : i32
    %c0_i32_0 = arith.constant 0 : i32
    %c0_i32_1 = arith.constant 0 : i32
    return %c0_i32, %c0_i32_0 : i32, i32
  }
  func.func @transform_7(%arg0: i32) -> (i32, i32) {
    %c0_i32 = arith.constant 0 : i32
    %c0_i32_0 = arith.constant 0 : i32
    %c0_i32_1 = arith.constant 0 : i32
    return %c0_i32, %c0_i32_0 : i32, i32
  }
  func.func @transform_8(%arg0: i32) -> (i32, i32) {
    %c0_i32 = arith.constant 0 : i32
    %c0_i32_0 = arith.constant 0 : i32
    %c0_i32_1 = arith.constant 0 : i32
    return %c0_i32, %c0_i32_0 : i32, i32
  }
  func.func @transform_9(%arg0: i32) -> (i32, i32) {
    %c0_i32 = arith.constant 0 : i32
    %c0_i32_0 = arith.constant 0 : i32
    %c0_i32_1 = arith.constant 0 : i32
    return %c0_i32, %c0_i32_0 : i32, i32
  }
  func.func @transform_10(%arg0: i32) -> (i32, i32) {
    %c0_i32 = arith.constant 0 : i32
    %c0_i32_0 = arith.constant 0 : i32
    return %arg0, %c0_i32 : i32, i32
  }
}

</mosaic_0001>

<llo_original>
// kernel: tpu_custom_call.1
$region0: #{tpu_custom_call.1}
  #allocation0 [shape = 'u32[]', space=smem, size = 0x4, offset = 0x4, fixed_abs, tag = 'smem constant byte address 0x4 - core index']
  #allocation1 [shape = 'u32[144,128]{1,0:T(1,128)}', space=vmem, size = 0x12000, scoped, tag = 'internal scratch']
  %s0 = inlined_call_operand.vmem [shape: f32[8,32], index: 0, kind: input, shape index: {}]
  %s1 = inlined_call_operand.vmem [shape: bf16[32,64], index: 1, kind: input, shape index: {}]
  %s2 = inlined_call_operand.vmem [shape: f32[1,64], index: 2, kind: input, shape index: {}]
  %s3 = inlined_call_operand.vmem [shape: bf16[64,32], index: 3, kind: input, shape index: {}]
  %s4 = inlined_call_operand.vmem [shape: f32[1,32], index: 4, kind: input, shape index: {}]
  %s5 = inlined_call_operand.vmem [shape: f32[8,16], index: 5, kind: input, shape index: {}]
  %s6 = inlined_call_operand.vmem [shape: bf16[16,64], index: 6, kind: input, shape index: {}]
  %s7 = inlined_call_operand.vmem [shape: f32[1,64], index: 7, kind: input, shape index: {}]
  %s8 = inlined_call_operand.vmem [shape: bf16[64,32], index: 8, kind: input, shape index: {}]
  %s9 = inlined_call_operand.vmem [shape: f32[1,32], index: 9, kind: input, shape index: {}]
  %s10 = inlined_call_operand.hbm [shape: f32[8,64], index: 10, kind: output, shape index: {}]
  %s11 = sld [smem:[#allocation0]]
  $region50: #{tpu_custom_call.1} parent=0
    _
  %s13 = ssub.s32 1, %s11
  %s14 = scalar_select 0, %s13, %s11
  $region1: #{tpu_custom_call.1} parent=0
    #allocation2 [shape = 'u8[4096]{0}', space=vmem, size = 0x1000, scoped, tag = 'output window, operand 0, single buffered']
    #allocation3 [shape = 's32[1]{0}', space=sflag, size = 0x4, scoped, tag = 'scoped memory for tpu_custom_call.1']
    %15 = vsyncpa [#allocation3], 0
    // Predicated region
    $region2: #{tpu_custom_call.1} parent=1 // pred_check
      _
    $region3: #{tpu_custom_call.1} parent=1 // pred_check_branch
      %17 = sbr.rel (0) target = $region5
    $region4: #{tpu_custom_call.1} parent=1 // pred_region
      _
    $region5: #{tpu_custom_call.1} parent=1 // pred_fallthru
      _
    // Predicated region
    $region6: #{tpu_custom_call.1} parent=1 // pred_check
      _
    $region7: #{tpu_custom_call.1} parent=1 // pred_check_branch
      %19 = sbr.rel (0) target = $region9
    $region8: #{tpu_custom_call.1} parent=1 // pred_region
      _
    $region9: #{tpu_custom_call.1} parent=1 // pred_fallthru
      _
    // Predicated region
    $region10: #{tpu_custom_call.1} parent=1 // pred_check
      _
    $region11: #{tpu_custom_call.1} parent=1 // pred_check_branch
      %21 = sbr.rel (0) target = $region13
    $region12: #{tpu_custom_call.1} parent=1 // pred_region
      _
    $region13: #{tpu_custom_call.1} parent=1 // pred_fallthru
      _
    // Predicated region
    $region14: #{tpu_custom_call.1} parent=1 // pred_check
      _
    $region15: #{tpu_custom_call.1} parent=1 // pred_check_branch
      %23 = sbr.rel (0) target = $region17
    $region16: #{tpu_custom_call.1} parent=1 // pred_region
      _
    $region17: #{tpu_custom_call.1} parent=1 // pred_fallthru
      _
    // Predicated region
    $region18: #{tpu_custom_call.1} parent=1 // pred_check
      _
    $region19: #{tpu_custom_call.1} parent=1 // pred_check_branch
      %25 = sbr.rel (0) target = $region21
    $region20: #{tpu_custom_call.1} parent=1 // pred_region
      _
    $region21: #{tpu_custom_call.1} parent=1 // pred_fallthru
      _
    // Predicated region
    $region22: #{tpu_custom_call.1} parent=1 // pred_check
      _
    $region23: #{tpu_custom_call.1} parent=1 // pred_check_branch
      %27 = sbr.rel (0) target = $region25
    $region24: #{tpu_custom_call.1} parent=1 // pred_region
      _
    $region25: #{tpu_custom_call.1} parent=1 // pred_fallthru
      _
    // Predicated region
    $region26: #{tpu_custom_call.1} parent=1 // pred_check
      _
    $region27: #{tpu_custom_call.1} parent=1 // pred_check_branch
      %29 = sbr.rel (0) target = $region29
    $region28: #{tpu_custom_call.1} parent=1 // pred_region
      _
    $region29: #{tpu_custom_call.1} parent=1 // pred_fallthru
      _
    // Predicated region
    $region30: #{tpu_custom_call.1} parent=1 // pred_check
      _
    $region31: #{tpu_custom_call.1} parent=1 // pred_check_branch
      %31 = sbr.rel (0) target = $region33
    $region32: #{tpu_custom_call.1} parent=1 // pred_region
      _
    $region33: #{tpu_custom_call.1} parent=1 // pred_fallthru
      _
    // Predicated region
    $region34: #{tpu_custom_call.1} parent=1 // pred_check
      _
    $region35: #{tpu_custom_call.1} parent=1 // pred_check_branch
      %33 = sbr.rel (0) target = $region37
    $region36: #{tpu_custom_call.1} parent=1 // pred_region
      _
    $region37: #{tpu_custom_call.1} parent=1 // pred_fallthru
      _
    // Predicated region
    $region38: #{tpu_custom_call.1} parent=1 // pred_check
      _
    $region39: #{tpu_custom_call.1} parent=1 // pred_check_branch
      %35 = sbr.rel (0) target = $region41
    $region40: #{tpu_custom_call.1} parent=1 // pred_region
      _
    $region41: #{tpu_custom_call.1} parent=1 // pred_fallthru
      _
    %v37 = vld [vmem:[%s0] sm:$0xff]
    %v38 = vpack.c.bf16 %v37, %v37
    %v39 = vld [vmem:[%s1] sm:$0xf]
    %v40 = vld [vmem:[%s1 + $0x4] sm:$0xf]
    %v41 = vld [vmem:[%s1 + $0x8] sm:$0xf]
    %v42 = vld [vmem:[%s1 + $0xc] sm:$0xf]
    %v43 = vld [vmem:[%s2] sm:$0x1]
    %v45 = vlaneseq
    %v46 = vshrl.u32 %v45, 7
    %v47 = vsub.s32 0, %v46
    %v48 = vrot.slane %v43, %v47
    %v54 = vunpack.c.l.b16 %v39
    %v55 = vunpack.c.l.b16 %v40
    %v56 = vunpack.c.l.b16 %v41
    %v57 = vunpack.c.l.b16 %v42
    %v58 = vpack.c.b16 %v55, %v54
    %v59 = vpack.c.b16 %v57, %v56
    %vm62 = vcmask 261120
    %v64 = vsel %vm62, %v38, 0
    %66 = vmatprep.subr.bf16.mxu0 0
    %67 = vmatpush1.bf16.msra.mxu0 %v58
    %68 = vmatprep.subr.bf16.mxu0 0
    %69 = vmatpush1.bf16.msra.mxu0 %v59
    %70 = vmatprep.subr.bf16.mxu0 0
    %71 = vmatpush1.bf16.msra.mxu0 0
    %72 = vmatprep.subr.bf16.mxu0 0
    %73 = vmatpush1.bf16.msra.mxu0 0
    %74 = vmatprep.subr.bf16.mxu0 0
    %75 = vmatpush1.bf16.msra.mxu0 0
    %76 = vmatprep.subr.bf16.mxu0 0
    %77 = vmatpush1.bf16.msra.mxu0 0
    %78 = vmatprep.subr.bf16.mxu0 0
    %79 = vmatpush1.bf16.msra.mxu0 0
    %80 = vmatprep.subr.bf16.mxu0 0
    %81 = vmatpush1.bf16.msra.mxu0 0
    %82 = vmatprep.subr.bf16.mxu0 0
    %83 = vmatpush1.bf16.msra.mxu0 0
    %84 = vmatprep.subr.bf16.mxu0 0
    %85 = vmatpush1.bf16.msra.mxu0 0
    %86 = vmatprep.subr.bf16.mxu0 0
    %87 = vmatpush1.bf16.msra.mxu0 0
    %88 = vmatprep.subr.bf16.mxu0 0
    %89 = vmatpush1.bf16.msra.mxu0 0
    %90 = vmatprep.subr.bf16.mxu0 0
    %91 = vmatpush1.bf16.msra.mxu0 0
    %92 = vmatprep.subr.bf16.mxu0 0
    %93 = vmatpush1.bf16.msra.mxu0 0
    %94 = vmatprep.subr.bf16.mxu0 0
    %95 = vmatpush1.bf16.msra.mxu0 0
    %96 = vmatprep.subr.bf16.mxu0 0
    %97 = vmatpush1.bf16.msra.mxu0 0
    %98 = vmatprep.mubr.bf16.mxu0 0
    %99 = vmatmul.mubr.bf16.gmra.mrb[0].mxu0 %v64
    %v100 = vpop.f32.mrb[0].mxu0
    %v101 = vadd.f32 %v48, %v100
    %v102 = vpop.f32.mrb[0].mxu0
    %v103 = vpop.f32.mrb[0].mxu0
    %v104 = vpop.f32.mrb[0].mxu0
    %105 = vdwg.mxu0
    %v106 = vmax.f32 %v101, 0.0
    %v107 = vpack.c.bf16 %v106, %v106
    %v108 = vld [vmem:[%s3] sm:$0xf]
    %v109 = vld [vmem:[%s3 + $0x4] sm:$0xf]
    %v110 = vld [vmem:[%s3 + $0x8] sm:$0xf]
    %v111 = vld [vmem:[%s3 + $0xc] sm:$0xf]
    %v112 = vld [vmem:[%s3 + $0x10] sm:$0xf]
    %v113 = vld [vmem:[%s3 + $0x14] sm:$0xf]
    %v114 = vld [vmem:[%s3 + $0x18] sm:$0xf]
    %v115 = vld [vmem:[%s3 + $0x1c] sm:$0xf]
    %v116 = vld [vmem:[%s4] sm:$0x1]
    %v118 = vlaneseq
    %v119 = vshrl.u32 %v118, 7
    %v120 = vsub.s32 0, %v119
    %v121 = vrot.slane %v116, %v120
    %v131 = vunpack.c.l.b16 %v108
    %v132 = vunpack.c.l.b16 %v109
    %v133 = vunpack.c.l.b16 %v110
    %v134 = vunpack.c.l.b16 %v111
    %v135 = vunpack.c.l.b16 %v112
    %v136 = vunpack.c.l.b16 %v113
    %v137 = vunpack.c.l.b16 %v114
    %v138 = vunpack.c.l.b16 %v115
    %v139 = vpack.c.b16 %v132, %v131
    %v140 = vpack.c.b16 %v134, %v133
    %v141 = vpack.c.b16 %v136, %v135
    %v142 = vpack.c.b16 %v138, %v137
    %vm147 = vcmask 523264
    %v149 = vsel %vm147, %v107, 0
    %151 = vmatprep.subr.bf16.mxu0 0
    %152 = vmatpush1.bf16.msra.mxu0 %v139
    %153 = vmatprep.subr.bf16.mxu0 0
    %154 = vmatpush1.bf16.msra.mxu0 %v140
    %155 = vmatprep.subr.bf16.mxu0 0
    %156 = vmatpush1.bf16.msra.mxu0 %v141
    %157 = vmatprep.subr.bf16.mxu0 0
    %158 = vmatpush1.bf16.msra.mxu0 %v142
    %159 = vmatprep.subr.bf16.mxu0 0
    %160 = vmatpush1.bf16.msra.mxu0 0
    %161 = vmatprep.subr.bf16.mxu0 0
    %162 = vmatpush1.bf16.msra.mxu0 0
    %163 = vmatprep.subr.bf16.mxu0 0
    %164 = vmatpush1.bf16.msra.mxu0 0
    %165 = vmatprep.subr.bf16.mxu0 0
    %166 = vmatpush1.bf16.msra.mxu0 0
    %167 = vmatprep.subr.bf16.mxu0 0
    %168 = vmatpush1.bf16.msra.mxu0 0
    %169 = vmatprep.subr.bf16.mxu0 0
    %170 = vmatpush1.bf16.msra.mxu0 0
    %171 = vmatprep.subr.bf16.mxu0 0
    %172 = vmatpush1.bf16.msra.mxu0 0
    %173 = vmatprep.subr.bf16.mxu0 0
    %174 = vmatpush1.bf16.msra.mxu0 0
    %175 = vmatprep.subr.bf16.mxu0 0
    %176 = vmatpush1.bf16.msra.mxu0 0
    %177 = vmatprep.subr.bf16.mxu0 0
    %178 = vmatpush1.bf16.msra.mxu0 0
    %179 = vmatprep.subr.bf16.mxu0 0
    %180 = vmatpush1.bf16.msra.mxu0 0
    %181 = vmatprep.subr.bf16.mxu0 0
    %182 = vmatpush1.bf16.msra.mxu0 0
    %183 = vmatprep.mubr.bf16.mxu0 0
    %184 = vmatmul.mubr.bf16.gmra.mrb[0].mxu0 %v149
    %v185 = vpop.f32.mrb[0].mxu0
    %v186 = vadd.f32 %v121, %v185
    %v187 = vpop.f32.mrb[0].mxu0
    %v188 = vpop.f32.mrb[0].mxu0
    %v189 = vpop.f32.mrb[0].mxu0
    %190 = vdwg.mxu0
    %v191 = vmul.f32 %v186, 0.5
    %v192 = vmul.f32 %v191, 1.442695
    %v193 = vpow.pop %v192
    %v194 = vld [vmem:[%s5] sm:$0xff]
    %196 = vrot.lane.b32.xlu0 %v194, 16
    %v197 = vpop.permute.xlu0 %196
    %v199 = vmul.f32 %v193, %v197
    %201 = vrot.lane.b32.xlu0 %v199, 112
    %v202 = vpop.permute.xlu0 %201
    %v204 = vadd.f32 %v186, %v202
    %v205 = vpack.c.bf16 %v204, %v204
    %v206 = vld [vmem:[%s6] sm:$0xf]
    %v207 = vld [vmem:[%s6 + $0x4] sm:$0xf]
    %v208 = vld [vmem:[%s7] sm:$0x1]
    %v210 = vlaneseq
    %v211 = vshrl.u32 %v210, 7
    %v212 = vsub.s32 0, %v211
    %v213 = vrot.slane %v208, %v212
    %v217 = vunpack.c.l.b16 %v206
    %v218 = vunpack.c.l.b16 %v207
    %v219 = vpack.c.b16 %v218, %v217
    %vm221 = vcmask 130048
    %v223 = vsel %vm221, %v205, 0
    %225 = vmatprep.subr.bf16.mxu0 0
    %226 = vmatpush1.bf16.msra.mxu0 %v219
    %227 = vmatprep.subr.bf16.mxu0 0
    %228 = vmatpush1.bf16.msra.mxu0 0
    %229 = vmatprep.subr.bf16.mxu0 0
    %230 = vmatpush1.bf16.msra.mxu0 0
    %231 = vmatprep.subr.bf16.mxu0 0
    %232 = vmatpush1.bf16.msra.mxu0 0
    %233 = vmatprep.subr.bf16.mxu0 0
    %234 = vmatpush1.bf16.msra.mxu0 0
    %235 = vmatprep.subr.bf16.mxu0 0
    %236 = vmatpush1.bf16.msra.mxu0 0
    %237 = vmatprep.subr.bf16.mxu0 0
    %238 = vmatpush1.bf16.msra.mxu0 0
    %239 = vmatprep.subr.bf16.mxu0 0
    %240 = vmatpush1.bf16.msra.mxu0 0
    %241 = vmatprep.subr.bf16.mxu0 0
    %242 = vmatpush1.bf16.msra.mxu0 0
    %243 = vmatprep.subr.bf16.mxu0 0
    %244 = vmatpush1.bf16.msra.mxu0 0
    %245 = vmatprep.subr.bf16.mxu0 0
    %246 = vmatpush1.bf16.msra.mxu0 0
    %247 = vmatprep.subr.bf16.mxu0 0
    %248 = vmatpush1.bf16.msra.mxu0 0
    %249 = vmatprep.subr.bf16.mxu0 0
    %250 = vmatpush1.bf16.msra.mxu0 0
    %251 = vmatprep.subr.bf16.mxu0 0
    %252 = vmatpush1.bf16.msra.mxu0 0
    %253 = vmatprep.subr.bf16.mxu0 0
    %254 = vmatpush1.bf16.msra.mxu0 0
    %255 = vmatprep.subr.bf16.mxu0 0
    %256 = vmatpush1.bf16.msra.mxu0 0
    %257 = vmatprep.mubr.bf16.mxu0 0
    %258 = vmatmul.mubr.bf16.gmra.mrb[0].mxu0 %v223
    %v259 = vpop.f32.mrb[0].mxu0
    %v260 = vadd.f32 %v213, %v259
    %v261 = vpop.f32.mrb[0].mxu0
    %v262 = vpop.f32.mrb[0].mxu0
    %v263 = vpop.f32.mrb[0].mxu0
    %264 = vdwg.mxu0
    %v265 = vmax.f32 %v260, 0.0
    %v266 = vpack.c.bf16 %v265, %v265
    %v267 = vld [vmem:[%s8] sm:$0xf]
    %v268 = vld [vmem:[%s8 + $0x4] sm:$0xf]
    %v269 = vld [vmem:[%s8 + $0x8] sm:$0xf]
    %v270 = vld [vmem:[%s8 + $0xc] sm:$0xf]
    %v271 = vld [vmem:[%s8 + $0x10] sm:$0xf]
    %v272 = vld [vmem:[%s8 + $0x14] sm:$0xf]
    %v273 = vld [vmem:[%s8 + $0x18] sm:$0xf]
    %v274 = vld [vmem:[%s8 + $0x1c] sm:$0xf]
    %v275 = vld [vmem:[%s9] sm:$0x1]
    %v277 = vlaneseq
    %v278 = vshrl.u32 %v277, 7
    %v279 = vsub.s32 0, %v278
    %v280 = vrot.slane %v275, %v279
    %v290 = vunpack.c.l.b16 %v267
    %v291 = vunpack.c.l.b16 %v268
    %v292 = vunpack.c.l.b16 %v269
    %v293 = vunpack.c.l.b16 %v270
    %v294 = vunpack.c.l.b16 %v271
    %v295 = vunpack.c.l.b16 %v272
    %v296 = vunpack.c.l.b16 %v273
    %v297 = vunpack.c.l.b16 %v274
    %v298 = vpack.c.b16 %v291, %v290
    %v299 = vpack.c.b16 %v293, %v292
    %v300 = vpack.c.b16 %v295, %v294
    %v301 = vpack.c.b16 %v297, %v296
    %v307 = vsel %vm147, %v266, 0
    %309 = vmatprep.subr.bf16.mxu0 0
    %310 = vmatpush1.bf16.msra.mxu0 %v298
    %311 = vmatprep.subr.bf16.mxu0 0
    %312 = vmatpush1.bf16.msra.mxu0 %v299
    %313 = vmatprep.subr.bf16.mxu0 0
    %314 = vmatpush1.bf16.msra.mxu0 %v300
    %315 = vmatprep.subr.bf16.mxu0 0
    %316 = vmatpush1.bf16.msra.mxu0 %v301
    %317 = vmatprep.subr.bf16.mxu0 0
    %318 = vmatpush1.bf16.msra.mxu0 0
    %319 = vmatprep.subr.bf16.mxu0 0
    %320 = vmatpush1.bf16.msra.mxu0 0
    %321 = vmatprep.subr.bf16.mxu0 0
    %322 = vmatpush1.bf16.msra.mxu0 0
    %323 = vmatprep.subr.bf16.mxu0 0
    %324 = vmatpush1.bf16.msra.mxu0 0
    %325 = vmatprep.subr.bf16.mxu0 0
    %326 = vmatpush1.bf16.msra.mxu0 0
    %327 = vmatprep.subr.bf16.mxu0 0
    %328 = vmatpush1.bf16.msra.mxu0 0
    %329 = vmatprep.subr.bf16.mxu0 0
    %330 = vmatpush1.bf16.msra.mxu0 0
    %331 = vmatprep.subr.bf16.mxu0 0
    %332 = vmatpush1.bf16.msra.mxu0 0
    %333 = vmatprep.subr.bf16.mxu0 0
    %334 = vmatpush1.bf16.msra.mxu0 0
    %335 = vmatprep.subr.bf16.mxu0 0
    %336 = vmatpush1.bf16.msra.mxu0 0
    %337 = vmatprep.subr.bf16.mxu0 0
    %338 = vmatpush1.bf16.msra.mxu0 0
    %339 = vmatprep.subr.bf16.mxu0 0
    %340 = vmatpush1.bf16.msra.mxu0 0
    %341 = vmatprep.mubr.bf16.mxu0 0
    %342 = vmatmul.mubr.bf16.gmra.mrb[0].mxu0 %v307
    %v343 = vpop.f32.mrb[0].mxu0
    %v344 = vadd.f32 %v280, %v343
    %v345 = vpop.f32.mrb[0].mxu0
    %v346 = vpop.f32.mrb[0].mxu0
    %v347 = vpop.f32.mrb[0].mxu0
    %348 = vdwg.mxu0
    %v349 = vsub.f32 0.0, %v344
    %v350 = vmul.f32 %v349, 1.442695
    %v351 = vpow.pop %v350
    %v352 = vadd.f32 %v351, 1.0
    %v353 = vrcp.pop %v352
    %355 = vrot.lane.b32.xlu0 %v353, 32
    %v356 = vpop.permute.xlu0 %355
    %v358 = vsel %vm62, %v186, %v356
    %359 = vst.msk [vmem:[#allocation2] sm:$0xff] %vm147, %v358
    // Predicated region
    $region42: #{tpu_custom_call.1} parent=1 // pred_check
      _
    $region43: #{tpu_custom_call.1} parent=1 // pred_check_branch
      %361 = sbr.rel (0) target = $region45
    $region44: #{tpu_custom_call.1} parent=1 // pred_region
      %s363 = ssub.s32 128, 128
      %364 = vsyncadd [#allocation3], %s363
      %s366 = sshll.u32 [#allocation2], 4
      %s367 = int_to_ptr.vmem [resolvable:$true] %s366
      %369 = dma.vmem_to_hbm [thread:$0]  %s367, 128, %s10, [#allocation3]
    $region45: #{tpu_custom_call.1} parent=1 // pred_fallthru
      _
    // Predicated region
    $region46: #{tpu_custom_call.1} parent=1 // pred_check
      _
    $region47: #{tpu_custom_call.1} parent=1 // pred_check_branch
      %371 = sbr.rel (0) target = $region49
    $region48: #{tpu_custom_call.1} parent=1 // pred_region
      %372 = dma.done [#allocation3], 128
    $region49: #{tpu_custom_call.1} parent=1 // pred_fallthru
      _
    %373 = vsyncpa [#allocation3], 1

</llo_original>
